<compile_context>
chip_gen: v5e
topology: v5e:2x2
jax: 0.10.0
libtpu: 0.0.40
codegen_flags: <defaults>
</compile_context>

<pallas_src>
import jax
import jax.numpy as jnp
from jax import lax
from jax.experimental import pallas as pl
from jax.experimental.pallas import tpu as pltpu


_TARGET_TILE_BYTES = 8 << 20   # per-grid-step input-tile budget (2-8 MiB sweet spot)
_MAX_BLOCK_B = 4096
_MIN_BLOCK_B_TILED = 256


def _round_up(x, m):
    return (x + m - 1) // m * m


def _cdiv(a, b):
    return -(-a // b)


def _choose_tiles(B, F, K, itemsize):
    """Pick (block_b, block_f) so each grid step moves ~_TARGET_TILE_BYTES of input."""
    bytes_per_row = F * itemsize

    if B <= 256 or B * bytes_per_row <= _TARGET_TILE_BYTES:
        # Whole (8-padded) batch fits the tile budget (or batch is tiny): one batch
        # block equal to the full padded dim (satisfies the lane constraint for any B).
        block_b = _round_up(B, 8)
    else:
        # Size by bytes, clamp to [256, 4096] rows (multiples of 128 for the
        # lane-dense output), then even-split so the grid has >= 2 batch steps
        # (keeps both v7x TensorCores busy) with minimal zero-padding waste.
        bb = _TARGET_TILE_BYTES // bytes_per_row
        bb = min(_MAX_BLOCK_B, max(_MIN_BLOCK_B_TILED, (bb // 128) * 128))
        nb = max(2, _cdiv(B, bb))
        block_b = max(128, _round_up(_cdiv(B, nb), 128))

    # Feature tile: keep the per-step x + vt + w tiles within the byte budget.
    max_f = _TARGET_TILE_BYTES // ((block_b + K + 1) * itemsize)
    if F <= max_f:
        block_f = F                      # full dim -> no 128 constraint needed
    else:
        block_f = max(128, (max_f // 128) * 128)
    return int(block_b), int(block_f)


def _second_order_kernel(x_ref, vt_ref, w_ref, o_ref, xvt_acc, sp_acc):
    # x_ref  : (block_b, block_f)  input dtype (f32 or bf16)
    # vt_ref : (K, block_f)        same dtype as x
    # w_ref  : (1, block_f)        same dtype as x, w[f] = sum_k v[f,k]^2
    # o_ref  : (1, block_b)        output dtype (== input dtype), lane-dense row
    # xvt_acc: (K, block_b) f32    partial (x @ v)^T accumulator over F tiles
    # sp_acc : (1, block_b) f32    partial sum_f x^2 * w accumulator over F tiles
    fi = pl.program_id(1)

    @pl.when(fi == 0)
    def _init():
        xvt_acc[...] = jnp.zeros_like(xvt_acc)
        sp_acc[...] = jnp.zeros_like(sp_acc)

    x = x_ref[...]

    # Partial (x @ v)^T for this feature tile: NT matmul on the MXU contracting the
    # feature axis of both operands, f32 accumulation -> (K, block_b).
    xvt_acc[...] += lax.dot_general(
        vt_ref[...], x, (((1,), (1,)), ((), ())),
        preferred_element_type=jnp.float32,
    )

    # Partial sum_f x[b,f]^2 * w[f]: (1, block_f) . (block_b, block_f)^T -> (1, block_b).
    # Square in the input dtype (no f32 temp materialized); MXU accumulates in f32.
    sp_acc[...] += lax.dot_general(
        w_ref[...], x * x, (((1,), (1,)), ((), ())),
        preferred_element_type=jnp.float32,
    )

    @pl.when(fi == pl.num_programs(1) - 1)
    def _finalize():
        xvt = xvt_acc[...]
        pow_sum = jnp.sum(xvt * xvt, axis=0, keepdims=True)   # sum_k (x @ v)^2
        o_ref[...] = (0.5 * (pow_sum - sp_acc[...])).astype(o_ref.dtype)


def second_order_interaction(x, v, *, block_b=None, block_f=None):
    """x: (B, n_features), v: (n_features, n_factors) -> (B, 1), dtype of x."""
    B, F = x.shape
    Fv, K = v.shape
    assert Fv == F, "v must be (n_features, n_factors)"

    itemsize = jnp.dtype(x.dtype).itemsize
    bb_auto, bf_auto = _choose_tiles(B, F, K, itemsize)
    block_b = int(block_b) if block_b is not None else bb_auto
    block_f = int(block_f) if block_f is not None else bf_auto

    B_pad = _round_up(B, block_b)
    F_pad = _round_up(F, block_f)

    assert block_b % 8 == 0, "block_b must be a multiple of 8"
    assert block_b == B_pad or block_b % 128 == 0, \
        "block_b must be a multiple of 128 when tiling the batch"
    assert block_f == F_pad or block_f % 128 == 0, \
        "block_f must be a multiple of 128 when tiling features"

    x_p = x
    if (B_pad, F_pad) != (B, F):
        x_p = jnp.pad(x, ((0, B_pad - B), (0, F_pad - F)))

    # Loop-invariant operands prepared once in the wrapper (free layout plumbing).
    vt = jnp.asarray(v).T.astype(x.dtype)                               # (K, F)
    w = jnp.sum(jnp.asarray(v, jnp.float32) ** 2, axis=1)[None, :]      # (1, F)
    w = w.astype(x.dtype)
    if F_pad != F:
        vt = jnp.pad(vt, ((0, 0), (0, F_pad - F)))
        w = jnp.pad(w, ((0, 0), (0, F_pad - F)))

    grid = (B_pad // block_b, F_pad // block_f)

    out_row = pl.pallas_call(
        _second_order_kernel,
        out_shape=jax.ShapeDtypeStruct((1, B_pad), x.dtype),
        grid_spec=pltpu.PrefetchScalarGridSpec(
            num_scalar_prefetch=0,
            grid=grid,
            in_specs=[
                pl.BlockSpec((block_b, block_f), lambda i, fi: (i, fi)),  # x tile
                pl.BlockSpec((K, block_f), lambda i, fi: (0, fi)),        # v^T tile
                pl.BlockSpec((1, block_f), lambda i, fi: (0, fi)),        # w tile
            ],
            out_specs=pl.BlockSpec((1, block_b), lambda i, fi: (0, i)),   # lane-dense
            scratch_shapes=[
                pltpu.VMEM((K, block_b), jnp.float32),   # xvt accumulator
                pltpu.VMEM((1, block_b), jnp.float32),   # sum_pow accumulator
            ],
        ),
        compiler_params=pltpu.CompilerParams(
            # batch axis parallel (v7x megacore shards it), feature axis is a reduction.
            dimension_semantics=("parallel", "arbitrary"),
            # 2 x 8 MiB double-buffered x tiles + small vt/w/scratch << 48 MiB;
            # 48 MiB is safe on v7x (64 MiB physical) and v5e/v6e (128 MiB).
            vmem_limit_bytes=48 * 1024 * 1024,
        ),
        cost_estimate=pl.CostEstimate(
            flops=2 * B_pad * F_pad * (K + 1) + 3 * B_pad * K,
            transcendentals=0,
            bytes_accessed=(B_pad * F_pad * itemsize
                            + (B_pad // block_b) * (K + 1) * F_pad * itemsize
                            + B_pad * itemsize),
        ),
    )(x_p, vt, w)

    # Restore the module's (B, 1) output shape (wrapper-side, free).
    return out_row[0, :B][:, None]


def second_order_reference(x, v):
    # HIGHEST precision so the f32 reference matmuls are not silently bf16.
    xv = jnp.dot(x, v, precision=lax.Precision.HIGHEST)
    sp = jnp.dot(x * x, v * v, precision=lax.Precision.HIGHEST)
    return (0.5 * ((xv * xv) - sp).sum(axis=1))[:, None]


if __name__ == "__main__":
    key = jax.random.PRNGKey(0)
    k_x, k_v, k_x2, k_v2, k_x3, k_v3 = jax.random.split(key, 6)

    # --- small shape matching the PyTorch module semantics ---
    batch, n_features, n_factors = 8, 32, 16
    x = jax.random.normal(k_x, (batch, n_features), dtype=jnp.float32)
    # Parameter init mirrors torch's uniform_(-0.01, 0.01), deterministic here.
    v = jax.random.uniform(
        k_v, (n_features, n_factors), dtype=jnp.float32, minval=-0.01, maxval=0.01
    )
    out = jax.block_until_ready(second_order_interaction(x, v))
    ref = second_order_reference(x, v)
    assert out.shape == (batch, 1) and out.dtype == jnp.float32
    assert jnp.allclose(out, ref, atol=1e-5, rtol=1e-5)

    # --- ragged batch (B not a multiple of 8) exercising the padded path ---
    B2, F2, K2 = 300, 64, 8
    x2 = jax.random.normal(k_x2, (B2, F2), dtype=jnp.float32)
    v2 = jax.random.uniform(
        k_v2, (F2, K2), dtype=jnp.float32, minval=-0.01, maxval=0.01
    )
    out2 = jax.block_until_ready(second_order_interaction(x2, v2))
    ref2 = second_order_reference(x2, v2)
    assert out2.shape == (B2, 1)
    assert jnp.allclose(out2, ref2, atol=1e-5, rtol=1e-4)

    # --- forced multi-tile grid (batch tiling + F-reduction axis + F padding) ---
    B3, F3, K3 = 512, 400, 16
    x3 = jax.random.normal(k_x3, (B3, F3), dtype=jnp.float32)
    v3 = jax.random.uniform(
        k_v3, (F3, K3), dtype=jnp.float32, minval=-0.01, maxval=0.01
    )
    out3 = jax.block_until_ready(
        second_order_interaction(x3, v3, block_b=256, block_f=128)   # grid (2, 4)
    )
    ref3 = second_order_reference(x3, v3)
    assert out3.shape == (B3, 1)
    assert jnp.allclose(out3, ref3, atol=1e-5, rtol=1e-4)

    # --- bf16 fast path (native-MXU operands, f32 accumulation): accuracy check ---
    x_bf = x.astype(jnp.bfloat16)
    out_bf = jax.block_until_ready(second_order_interaction(x_bf, v))
    ref_bf = second_order_reference(
        x_bf.astype(jnp.float32),
        v.astype(jnp.bfloat16).astype(jnp.float32),
    )
    assert out_bf.shape == (batch, 1) and out_bf.dtype == jnp.bfloat16
    assert jnp.allclose(out_bf.astype(jnp.float32), ref_bf, atol=5e-4, rtol=5e-2)

    print("KERNEL_OK")
</pallas_src>

<mosaic_0001>
module attributes {stable_mosaic.version = 11 : i64} {
  func.func @_second_order_kernel(%arg0: i32, %arg1: i32, %arg2: memref<8x32xf32, #tpu.memory_space<vmem>>, %arg3: memref<16x32xf32, #tpu.memory_space<vmem>>, %arg4: memref<1x32xf32, #tpu.memory_space<vmem>>, %arg5: memref<1x8xf32, #tpu.memory_space<vmem>>, %arg6: memref<16x8xf32, #tpu.memory_space<vmem>>, %arg7: memref<1x8xf32, #tpu.memory_space<vmem>>) attributes {dimension_semantics = [#tpu.dimension_semantics<parallel>, #tpu.dimension_semantics<arbitrary>], iteration_bounds = array<i64: 1, 1>, scalar_prefetch = 0 : i64, scratch_operands = 2 : i64, tpu.core_type = #tpu.core_type<tc>, window_params = [{transform_indices = @transform_0, window_bounds = array<i64: 8, 32>}, {transform_indices = @transform_1, window_bounds = array<i64: 16, 32>}, {transform_indices = @transform_2, window_bounds = array<i64: 1, 32>}, {transform_indices = @transform_3, window_bounds = array<i64: 1, 8>}]} {
    %c0_i32 = arith.constant 0 : i32
    %0 = arith.cmpi eq, %arg1, %c0_i32 : i32
    %1 = arith.extui %0 : i1 to i32
    %c0_i32_0 = arith.constant 0 : i32
    %2 = arith.cmpi ne, %1, %c0_i32_0 : i32
    scf.if %2 {
      %cst_17 = arith.constant 0.000000e+00 : f32
      %18 = vector.broadcast %cst_17 : f32 to vector<16x8xf32>
      %c0_18 = arith.constant 0 : index
      %c0_19 = arith.constant 0 : index
      %19 = vector.load %arg6[%c0_18, %c0_19] : memref<16x8xf32, #tpu.memory_space<vmem>>, vector<16x8xf32>
      tpu.vector_store %arg6[%c0_18, %c0_19], %18 {strides = array<i32>} : memref<16x8xf32, #tpu.memory_space<vmem>>, vector<16x8xf32>,
      %cst_20 = arith.constant 0.000000e+00 : f32
      %20 = vector.broadcast %cst_20 : f32 to vector<1x8xf32>
      %c0_21 = arith.constant 0 : index
      %c0_22 = arith.constant 0 : index
      %21 = vector.load %arg7[%c0_21, %c0_22] : memref<1x8xf32, #tpu.memory_space<vmem>>, vector<1x8xf32>
      tpu.vector_store %arg7[%c0_21, %c0_22], %20 {strides = array<i32>} : memref<1x8xf32, #tpu.memory_space<vmem>>, vector<1x8xf32>,
    } else {
    }
    %c0 = arith.constant 0 : index
    %c0_1 = arith.constant 0 : index
    %3 = vector.load %arg2[%c0, %c0_1] : memref<8x32xf32, #tpu.memory_space<vmem>>, vector<8x32xf32>
    %c0_2 = arith.constant 0 : index
    %c0_3 = arith.constant 0 : index
    %4 = vector.load %arg6[%c0_2, %c0_3] : memref<16x8xf32, #tpu.memory_space<vmem>>, vector<16x8xf32>
    %c0_4 = arith.constant 0 : index
    %c0_5 = arith.constant 0 : index
    %5 = vector.load %arg3[%c0_4, %c0_5] : memref<16x32xf32, #tpu.memory_space<vmem>>, vector<16x32xf32>
    %cst = arith.constant dense<0.000000e+00> : vector<16x8xf32>
    %6 = tpu.matmul %5, %3, %cst {dimension_numbers = #tpu.dot_dimension_numbers<[1], [1], [0], [0], [0, 0, 1, 0], [], []>} : vector<16x32xf32>, vector<8x32xf32>, vector<16x8xf32> -> vector<16x8xf32>
    %7 = arith.addf %4, %6 : vector<16x8xf32>
    %c0_6 = arith.constant 0 : index
    %c0_7 = arith.constant 0 : index
    %8 = vector.load %arg6[%c0_6, %c0_7] : memref<16x8xf32, #tpu.memory_space<vmem>>, vector<16x8xf32>
    tpu.vector_store %arg6[%c0_6, %c0_7], %7 {strides = array<i32>} : memref<16x8xf32, #tpu.memory_space<vmem>>, vector<16x8xf32>,
    %c0_8 = arith.constant 0 : index
    %c0_9 = arith.constant 0 : index
    %9 = vector.load %arg7[%c0_8, %c0_9] : memref<1x8xf32, #tpu.memory_space<vmem>>, vector<1x8xf32>
    %c0_10 = arith.constant 0 : index
    %c0_11 = arith.constant 0 : index
    %10 = vector.load %arg4[%c0_10, %c0_11] : memref<1x32xf32, #tpu.memory_space<vmem>>, vector<1x32xf32>
    %11 = arith.mulf %3, %3 : vector<8x32xf32>
    %cst_12 = arith.constant dense<0.000000e+00> : vector<1x8xf32>
    %12 = tpu.matmul %10, %11, %cst_12 {dimension_numbers = #tpu.dot_dimension_numbers<[1], [1], [0], [0], [0, 0, 1, 0], [], []>} : vector<1x32xf32>, vector<8x32xf32>, vector<1x8xf32> -> vector<1x8xf32>
    %13 = arith.addf %9, %12 : vector<1x8xf32>
    %c0_13 = arith.constant 0 : index
    %c0_14 = arith.constant 0 : index
    %14 = vector.load %arg7[%c0_13, %c0_14] : memref<1x8xf32, #tpu.memory_space<vmem>>, vector<1x8xf32>
    tpu.vector_store %arg7[%c0_13, %c0_14], %13 {strides = array<i32>} : memref<1x8xf32, #tpu.memory_space<vmem>>, vector<1x8xf32>,
    %c0_i32_15 = arith.constant 0 : i32
    %15 = arith.cmpi eq, %arg1, %c0_i32_15 : i32
    %16 = arith.extui %15 : i1 to i32
    %c0_i32_16 = arith.constant 0 : i32
    %17 = arith.cmpi ne, %16, %c0_i32_16 : i32
    scf.if %17 {
      %c0_17 = arith.constant 0 : index
      %c0_18 = arith.constant 0 : index
      %18 = vector.load %arg6[%c0_17, %c0_18] : memref<16x8xf32, #tpu.memory_space<vmem>>, vector<16x8xf32>
      %19 = arith.mulf %18, %18 : vector<16x8xf32>
      %cst_19 = arith.constant dense<0.000000e+00> : vector<8xf32>
      %20 = vector.multi_reduction <add>, %19, %cst_19 [0] : vector<16x8xf32> to vector<8xf32>
      %21 = vector.shape_cast %20 : vector<8xf32> to vector<1x8xf32>
      %c0_20 = arith.constant 0 : index
      %c0_21 = arith.constant 0 : index
      %22 = vector.load %arg7[%c0_20, %c0_21] : memref<1x8xf32, #tpu.memory_space<vmem>>, vector<1x8xf32>
      %23 = arith.subf %21, %22 : vector<1x8xf32>
      %cst_22 = arith.constant 5.000000e-01 : f32
      %24 = vector.broadcast %cst_22 : f32 to vector<1x8xf32>
      %25 = arith.mulf %24, %23 : vector<1x8xf32>
      %c0_23 = arith.constant 0 : index
      %c0_24 = arith.constant 0 : index
      %26 = vector.load %arg5[%c0_23, %c0_24] : memref<1x8xf32, #tpu.memory_space<vmem>>, vector<1x8xf32>
      tpu.vector_store %arg5[%c0_23, %c0_24], %25 {strides = array<i32>} : memref<1x8xf32, #tpu.memory_space<vmem>>, vector<1x8xf32>,
    } else {
    }
    return
  }
  func.func @transform_0(%arg0: i32, %arg1: i32) -> (i32, i32) {
    %c0_i32 = arith.constant 0 : i32
    return %arg0, %arg1 : i32, i32
  }
  func.func @transform_1(%arg0: i32, %arg1: i32) -> (i32, i32) {
    %c0_i32 = arith.constant 0 : i32
    %c0_i32_0 = arith.constant 0 : i32
    return %c0_i32, %arg1 : i32, i32
  }
  func.func @transform_2(%arg0: i32, %arg1: i32) -> (i32, i32) {
    %c0_i32 = arith.constant 0 : i32
    %c0_i32_0 = arith.constant 0 : i32
    return %c0_i32, %arg1 : i32, i32
  }
  func.func @transform_3(%arg0: i32, %arg1: i32) -> (i32, i32) {
    %c0_i32 = arith.constant 0 : i32
    %c0_i32_0 = arith.constant 0 : i32
    return %c0_i32, %arg0 : i32, i32
  }
}

</mosaic_0001>

<llo_original>
// kernel: tpu_custom_call.1
$region0: #{tpu_custom_call.1}
  #allocation0 [shape = 'u32[]', space=smem, size = 0x4, offset = 0x4, fixed_abs, tag = 'smem constant byte address 0x4 - core index']
  #allocation1 [shape = 'u32[72,128]{1,0:T(1,128)}', space=vmem, size = 0x9000, scoped, tag = 'internal scratch']
  #allocation2 [shape = 'f32[16,8]{1,0:T(8,128)}', space=vmem, size = 0x2000, scoped, tag = 'scratch operand']
  #allocation3 [shape = 'f32[1,8]{1,0:T(1,128)}', space=vmem, size = 0x200, scoped, tag = 'scratch operand']
  %s0 = inlined_call_operand.hbm [shape: f32[8,32], index: 0, kind: input, shape index: {}]
  %s1 = inlined_call_operand.hbm [shape: f32[16,32], index: 1, kind: input, shape index: {}]
  %s2 = inlined_call_operand.vmem [shape: f32[1,32], index: 2, kind: input, shape index: {}]
  %s3 = inlined_call_operand.hbm [shape: f32[1,8], index: 3, kind: output, shape index: {}]
  %s4 = sld [smem:[#allocation0]]
  $region38: #{tpu_custom_call.1} parent=0
    _
  %s6 = ssub.s32 1, %s4
  %s7 = scalar_select 0, %s6, %s4
  $region1: #{tpu_custom_call.1} parent=0
    #allocation4 [shape = 'u8[4096]{0}', space=vmem, size = 0x1000, scoped, tag = 'input window, operand 0, single buffered']
    #allocation5 [shape = 's32[1]{0}', space=sflag, size = 0x4, scoped, tag = 'scoped memory for tpu_custom_call.1']
    #allocation6 [shape = 's32[1]{0}', space=sflag, size = 0x4, scoped, tag = 'scoped memory for tpu_custom_call.1']
    #allocation7 [shape = 'u8[8192]{0}', space=vmem, size = 0x2000, scoped, tag = 'input window, operand 1, single buffered']
    #allocation8 [shape = 's32[1]{0}', space=sflag, size = 0x4, scoped, tag = 'scoped memory for tpu_custom_call.1']
    #allocation9 [shape = 'u8[512]{0}', space=vmem, size = 0x400, scoped, tag = 'output window, operand 0, single buffered']
    %8 = vsyncpa [#allocation5], 0
    %9 = vsyncpa [#allocation8], 0
    %10 = vsyncpa [#allocation6], 0
    // Predicated region
    $region2: #{tpu_custom_call.1} parent=1 // pred_check
      _
    $region3: #{tpu_custom_call.1} parent=1 // pred_check_branch
      %12 = sbr.rel (0) target = $region5
    $region4: #{tpu_custom_call.1} parent=1 // pred_region
      %14 = vsyncadd [#allocation5], 0
      %s16 = sshll.u32 %s0, 4
      %s17 = int_to_ptr.hbm [resolvable:$true] %s16
      %s18 = sshll.u32 [#allocation4], 4
      %s19 = int_to_ptr.vmem [resolvable:$true] %s18
      %21 = dma.hbm_to_vmem [thread:$0]  %s17, 128, %s19, [#allocation5]
    $region5: #{tpu_custom_call.1} parent=1 // pred_fallthru
      _
    // Predicated region
    $region6: #{tpu_custom_call.1} parent=1 // pred_check
      _
    $region7: #{tpu_custom_call.1} parent=1 // pred_check_branch
      %23 = sbr.rel (0) target = $region9
    $region8: #{tpu_custom_call.1} parent=1 // pred_region
      %25 = vsyncadd [#allocation8], 0
      %s26 = sshll.u32 %s1, 4
      %s27 = int_to_ptr.hbm [resolvable:$true] %s26
      %s28 = sshll.u32 [#allocation7], 4
      %s29 = int_to_ptr.vmem [resolvable:$true] %s28
      %34 = dma.hbm_to_vmem [thread:$0]  %s27, 256, %s29, [#allocation8], 128, 128, 8
    $region9: #{tpu_custom_call.1} parent=1 // pred_fallthru
      _
    // Predicated region
    $region10: #{tpu_custom_call.1} parent=1 // pred_check
      _
    $region11: #{tpu_custom_call.1} parent=1 // pred_check_branch
      %36 = sbr.rel (0) target = $region13
    $region12: #{tpu_custom_call.1} parent=1 // pred_region
      _
    $region13: #{tpu_custom_call.1} parent=1 // pred_fallthru
      _
    // Predicated region
    $region14: #{tpu_custom_call.1} parent=1 // pred_check
      _
    $region15: #{tpu_custom_call.1} parent=1 // pred_check_branch
      %38 = sbr.rel (0) target = $region17
    $region16: #{tpu_custom_call.1} parent=1 // pred_region
      %40 = dma.done [#allocation5], 128
    $region17: #{tpu_custom_call.1} parent=1 // pred_fallthru
      _
    // Predicated region
    $region18: #{tpu_custom_call.1} parent=1 // pred_check
      _
    $region19: #{tpu_custom_call.1} parent=1 // pred_check_branch
      %42 = sbr.rel (0) target = $region21
    $region20: #{tpu_custom_call.1} parent=1 // pred_region
      %44 = dma.done [#allocation8], 256
    $region21: #{tpu_custom_call.1} parent=1 // pred_fallthru
      _
    %p45 = scmp.eq.s32.totalorder 0, 0
    // Predicated region
    $region22: #{tpu_custom_call.1} parent=1 // pred_check
      %p46 = pneg %p45
    $region23: #{tpu_custom_call.1} parent=1 // pred_check_branch
      %48 = sbr.rel (%p46) target = $region25
    $region24: #{tpu_custom_call.1} parent=1 // pred_region
      %vm49 = vcmask 64512
      %50 = vst.msk [vmem:[#allocation2] sm:$0xff] %vm49, 0.0
      %51 = vst.msk [vmem:[#allocation2 + $0x8] sm:$0xff] %vm49, 0.0
      %vm52 = vcmask 57344
      %53 = vst.msk [vmem:[#allocation3] sm:$0x1] %vm52, 0.0
    $region25: #{tpu_custom_call.1} parent=1 // pred_fallthru
      _
    %v54 = vld [vmem:[#allocation4] sm:$0xff]
    %v55 = vld [vmem:[#allocation2] sm:$0xff]
    %v56 = vld [vmem:[#allocation2 + $0x8] sm:$0xff]
    %v57 = vld [vmem:[#allocation7] sm:$0xff]
    %v58 = vld [vmem:[#allocation7 + $0x8] sm:$0xff]
    %vm59 = vcmask 261120
    %v61 = vsel %vm59, %v57, 0
    %v64 = vsel %vm59, %v58, 0
    %v67 = vsel %vm59, %v54, 0
    %69 = vmatpush.xpose.msra.mxu0 0.0
    %70 = vmatpush.xpose.msra.mxu0 0.0
    %71 = vmatpush.xpose.msra.mxu0 0.0
    %72 = vmatpush.xpose.msra.mxu0 0.0
    %73 = vmatpush.xpose.msra.mxu0 0.0
    %74 = vmatpush.xpose.msra.mxu0 0.0
    %75 = vmatpush.xpose.msra.mxu0 0.0
    %76 = vmatpush.xpose.msra.mxu0 0.0
    %77 = vmatpush.xpose.msra.mxu0 0.0
    %78 = vmatpush.xpose.msra.mxu0 0.0
    %79 = vmatpush.xpose.msra.mxu0 0.0
    %80 = vmatpush.xpose.msra.mxu0 0.0
    %81 = vmatpush.xpose.msra.mxu0 0.0
    %82 = vmatpush.xpose.msra.mxu0 0.0
    %83 = vmatpush.xpose.msra.mxu0 0.0
    %84 = vmatpush.xpose.msra.mxu0 %v67
    %85 = vmatmul.f32.gmra.mxu0 %v61
    %v86 = vpop.f32.mrf.mxu0
    %v87 = vadd.f32 0.0, %v86
    %88 = vmatmul.f32.gmra.mxu0 %v64
    %v89 = vpop.f32.mrf.mxu0
    %v90 = vadd.f32 0.0, %v89
    %91 = vdwg.mxu0
    %v92 = vadd.f32 %v55, %v87
    %v93 = vadd.f32 %v56, %v90
    %vm94 = vcmask 64512
    %95 = vst.msk [vmem:[#allocation2] sm:$0xff] %vm94, %v92
    %96 = vst.msk [vmem:[#allocation2 + $0x8] sm:$0xff] %vm94, %v93
    %v97 = vld [vmem:[#allocation3] sm:$0x1]
    %v98 = vld [vmem:[%s2] sm:$0x1]
    %v99 = vmul.f32 %v54, %v54
    %v101 = vsel %vm59, %v98, 0
    %v104 = vsel %vm59, %v99, 0
    %106 = vmatpush.xpose.msra.mxu0 0.0
    %107 = vmatpush.xpose.msra.mxu0 0.0
    %108 = vmatpush.xpose.msra.mxu0 0.0
    %109 = vmatpush.xpose.msra.mxu0 0.0
    %110 = vmatpush.xpose.msra.mxu0 0.0
    %111 = vmatpush.xpose.msra.mxu0 0.0
    %112 = vmatpush.xpose.msra.mxu0 0.0
    %113 = vmatpush.xpose.msra.mxu0 0.0
    %114 = vmatpush.xpose.msra.mxu0 0.0
    %115 = vmatpush.xpose.msra.mxu0 0.0
    %116 = vmatpush.xpose.msra.mxu0 0.0
    %117 = vmatpush.xpose.msra.mxu0 0.0
    %118 = vmatpush.xpose.msra.mxu0 0.0
    %119 = vmatpush.xpose.msra.mxu0 0.0
    %120 = vmatpush.xpose.msra.mxu0 0.0
    %121 = vmatpush.xpose.msra.mxu0 %v104
    %122 = vmatmul.f32.gmra.mxu0 %v101
    %v123 = vpop.f32.mrf.mxu0
    %v124 = vadd.f32 0.0, %v123
    %125 = vdwg.mxu0
    %v126 = vadd.f32 %v97, %v124
    %vm127 = vcmask 57344
    %128 = vst.msk [vmem:[#allocation3] sm:$0x1] %vm127, %v126
    // Predicated region
    $region26: #{tpu_custom_call.1} parent=1 // pred_check
      %p129 = pneg %p45
    $region27: #{tpu_custom_call.1} parent=1 // pred_check_branch
      %131 = sbr.rel (%p129) target = $region29
    $region28: #{tpu_custom_call.1} parent=1 // pred_region
      %v132 = vld [vmem:[#allocation2] sm:$0xff]
      %v133 = vld [vmem:[#allocation2 + $0x8] sm:$0xff]
      %v134 = vmul.f32 %v132, %v132
      %v135 = vmul.f32 %v133, %v133
      %v136 = vsel %vm94, %v134, 0.0
      %v137 = vsel %vm94, %v135, 0.0
      %v138 = vadd.f32 %v136, %v137
      %v139 = vrot.slane %v138, 4
      %v140 = vadd.f32 %v138, %v139
      %v141 = vrot.slane %v140, 2
      %v142 = vadd.f32 %v140, %v141
      %v143 = vrot.slane %v142, 1
      %v144 = vadd.f32 %v142, %v143
      %v145 = vld [vmem:[#allocation3] sm:$0x1]
      %v146 = vsub.f32 %v144, %v145
      %v147 = vmul.f32 %v146, 0.5
      %148 = vst.msk [vmem:[#allocation9] sm:$0x1] %vm127, %v147
    $region29: #{tpu_custom_call.1} parent=1 // pred_fallthru
      _
    // Predicated region
    $region30: #{tpu_custom_call.1} parent=1 // pred_check
      _
    $region31: #{tpu_custom_call.1} parent=1 // pred_check_branch
      %150 = sbr.rel (0) target = $region33
    $region32: #{tpu_custom_call.1} parent=1 // pred_region
      %152 = vsyncadd [#allocation6], 0
      %s154 = sshll.u32 [#allocation9], 4
      %s155 = int_to_ptr.vmem [resolvable:$true] %s154
      %s156 = sshll.u32 %s3, 4
      %s157 = int_to_ptr.hbm [resolvable:$true] %s156
      %159 = dma.vmem_to_hbm [thread:$0]  %s155, 16, %s157, [#allocation6]
    $region33: #{tpu_custom_call.1} parent=1 // pred_fallthru
      _
    // Predicated region
    $region34: #{tpu_custom_call.1} parent=1 // pred_check
      _
    $region35: #{tpu_custom_call.1} parent=1 // pred_check_branch
      %161 = sbr.rel (0) target = $region37
    $region36: #{tpu_custom_call.1} parent=1 // pred_region
      %163 = dma.done [#allocation6], 16
    $region37: #{tpu_custom_call.1} parent=1 // pred_fallthru
      _
    %164 = vsyncpa [#allocation5], 1
    %165 = vsyncpa [#allocation8], 1
    %166 = vsyncpa [#allocation6], 1

</llo_original>
